<compile_context>
chip_gen: v7x
topology: tpu7x:2x2x1
jax: 0.10.0
libtpu: 0.0.40
codegen_flags: <defaults>
</compile_context>

<pallas_src>
import numpy as np
import jax
import jax.numpy as jnp
from jax.experimental import pallas as pl
from jax.experimental.pallas import tpu as pltpu


# ----------------------------------------------------------------------------
# Kernel
# ----------------------------------------------------------------------------
def generator_kernel(x_ref, w1_ref, b1_ref, w2_ref, b2_ref, o_ref):
    # x arrives in its native dtype (typically f32); cast to bf16 in-register
    # for the MXU — no separate XLA cast op, no extra HBM traffic.
    x = x_ref[...].astype(jnp.bfloat16)

    # Layer 1: bf16 MXU matmul, f32 accumulate; bias + ReLU in f32 on the VPU
    # (v5e has no bf16 VALUs — keep the elementwise epilogue f32).
    h = jnp.dot(x, w1_ref[...], preferred_element_type=jnp.float32)
    h = jnp.maximum(h + b1_ref[...], 0.0)

    # Layer 2: only the matmul operand is cast back to bf16 (keeps the MXU in
    # bf16 mode); bias add / ReLU remain f32.
    y = jnp.dot(h.astype(jnp.bfloat16), w2_ref[...],
                preferred_element_type=jnp.float32)
    y = jnp.maximum(y + b2_ref[...], 0.0)

    # bf16 store (o_ref dtype) halves the output bytes streamed to HBM.
    o_ref[...] = y.astype(o_ref.dtype)


# ----------------------------------------------------------------------------
# Cost / tiling helpers
# ----------------------------------------------------------------------------
def _cost_estimate(B, D, x_itemsize, out_itemsize):
    flops = 2 * 2 * B * D * D               # two (B,D)x(D,D) matmuls
    bytes_accessed = (
        B * D * x_itemsize                  # x streamed in (f32 by default)
        + 2 * D * D * 2                     # w1, w2 (bf16, DMA'd once)
        + 2 * D * 4                         # b1, b2 (f32)
        + B * D * out_itemsize              # output (bf16 by default)
    )
    return pl.CostEstimate(flops=flops, transcendentals=0,
                           bytes_accessed=bytes_accessed)


def _pick_tb(B, max_tb=1024, min_steps=4):
    """Pick a batch tile: a multiple of 8 that divides B, as large as possible
    up to `max_tb`, while keeping the grid length >= min_steps so that v7x's
    two TensorCores both get work and the DMA pipeline has steps to overlap.
    Returns None if no multiple-of-8 divisor exists (ragged batch)."""
    if B < 8 or B % 8 != 0:
        return None
    pref = min(max_tb, B, max(8, (B // min_steps) // 8 * 8))
    for tb in range(pref, 7, -8):
        if B % tb == 0:
            return tb
    return None


# ----------------------------------------------------------------------------
# Parameter preparation (ONE-TIME, outside the per-call path)
# ----------------------------------------------------------------------------
def prepare_params(w1_f32, b1_f32, w2_f32, b2_f32):
    """Convert f32 params to kernel storage dtypes once: bf16 weights
    (pre-transposed (D_in, D_out)), f32 (1, D) biases.  Do this at model-build
    time so the forward path has zero per-call casts."""
    return (jnp.asarray(w1_f32).astype(jnp.bfloat16),
            jnp.asarray(b1_f32, jnp.float32).reshape(1, -1),
            jnp.asarray(w2_f32).astype(jnp.bfloat16),
            jnp.asarray(b2_f32, jnp.float32).reshape(1, -1))


# ----------------------------------------------------------------------------
# Forward paths
# ----------------------------------------------------------------------------
def _forward_gridless(x, w1, b1, w2, b2, out_dtype):
    """Small/ragged batches: no grid, whole arrays resident in VMEM (skips the
    pipeline prologue/epilogue entirely)."""
    B, D = x.shape
    vmem = pl.BlockSpec(memory_space=pltpu.MemorySpace.VMEM)
    return pl.pallas_call(
        generator_kernel,
        out_shape=jax.ShapeDtypeStruct((B, D), out_dtype),
        in_specs=[vmem, vmem, vmem, vmem, vmem],
        out_specs=vmem,
        cost_estimate=_cost_estimate(B, D, x.dtype.itemsize,
                                     np.dtype(out_dtype).itemsize),
    )(x, w1, b1, w2, b2)


def _forward_batched(x, w1, b1, w2, b2, tb, out_dtype):
    """Large batches: tile the batch axis, keep weights/biases VMEM-resident
    across tiles (constant index_map => single DMA), batch axis parallel."""
    B, D = x.shape
    grid = (B // tb,)
    return pl.pallas_call(
        generator_kernel,
        out_shape=jax.ShapeDtypeStruct((B, D), out_dtype),
        grid_spec=pltpu.PrefetchScalarGridSpec(
            num_scalar_prefetch=0,
            grid=grid,
            in_specs=[
                pl.BlockSpec((tb, D), lambda i: (i, 0)),   # x streams with grid
                pl.BlockSpec((D, D), lambda i: (0, 0)),    # w1 resident
                pl.BlockSpec((1, D), lambda i: (0, 0)),    # b1 resident
                pl.BlockSpec((D, D), lambda i: (0, 0)),    # w2 resident
                pl.BlockSpec((1, D), lambda i: (0, 0)),    # b2 resident
            ],
            out_specs=pl.BlockSpec((tb, D), lambda i: (i, 0)),
        ),
        compiler_params=pltpu.CompilerParams(
            dimension_semantics=("parallel",),   # v7x: batch tiles split over TCs
        ),
        cost_estimate=_cost_estimate(B, D, x.dtype.itemsize,
                                     np.dtype(out_dtype).itemsize),
    )(x, w1, b1, w2, b2)


def generator_forward(x, w1, b1, w2, b2, *, out_dtype=jnp.bfloat16):
    """Generator forward: Linear -> ReLU -> Linear -> ReLU.

    x:       (B, D) float (f32 or bf16) — cast to bf16 inside the kernel.
    w1, w2:  (D, D) bf16, pre-transposed (D_in, D_out)   [see prepare_params]
    b1, b2:  (1, D) f32
    Returns (B, D) `out_dtype` (bf16 by default — documented accuracy choice).
    """
    B, D = x.shape
    tb = _pick_tb(B)
    if tb is None or B // tb < 2:
        # TODO(synk): pad very large ragged batches up to a multiple of 8 and
        # route them through the tiled path instead of the gridless fallback.
        return _forward_gridless(x, w1, b1, w2, b2, out_dtype)
    return _forward_batched(x, w1, b1, w2, b2, tb, out_dtype)


# ----------------------------------------------------------------------------
# Pure-JAX reference (same bf16-operand / f32-accumulate recipe)
# ----------------------------------------------------------------------------
def _reference(x, w1_bf16, b1, w2_bf16, b2):
    xb = x.astype(jnp.bfloat16)
    h = jnp.maximum(
        jnp.dot(xb, w1_bf16, preferred_element_type=jnp.float32) + b1, 0.0)
    y = jnp.maximum(
        jnp.dot(h.astype(jnp.bfloat16), w2_bf16,
                preferred_element_type=jnp.float32) + b2, 0.0)
    return y


if __name__ == "__main__":
    # Small shapes consistent with the module: batch=8, input_size=128.
    B, D = 8, 128

    key = jax.random.PRNGKey(0)
    kx, kw1, kw2, kxb = jax.random.split(key, 4)

    x = jax.random.normal(kx, (B, D), dtype=jnp.float32)

    # Parameters mirroring the module's init_weights convention (identity
    # weight, bias = 1e-5) plus a small perturbation so the check is
    # non-trivial.  Converted to kernel dtypes ONCE (not per call).
    w1_f32 = jnp.eye(D, dtype=jnp.float32) + 0.01 * jax.random.normal(kw1, (D, D), jnp.float32)
    w2_f32 = jnp.eye(D, dtype=jnp.float32) + 0.01 * jax.random.normal(kw2, (D, D), jnp.float32)
    b1_f32 = jnp.full((D,), 1e-5, dtype=jnp.float32)
    b2_f32 = jnp.full((D,), 1e-5, dtype=jnp.float32)
    w1, b1, w2, b2 = prepare_params(w1_f32, b1_f32, w2_f32, b2_f32)

    # --- Small-batch (gridless, whole-array-VMEM) path --------------------
    out = jax.block_until_ready(generator_forward(x, w1, b1, w2, b2))
    assert out.shape == (B, D) and out.dtype == jnp.bfloat16
    ref = _reference(x, w1, b1, w2, b2)
    assert jnp.allclose(out.astype(jnp.float32), ref, atol=3e-2, rtol=2e-2)
    # Sanity vs. pure f32 math (looser: bf16 operand + output quantization —
    # an explicit accuracy decision; pass out_dtype=jnp.float32 to tighten).
    ref_f32 = jnp.maximum(jnp.maximum(x @ w1_f32 + b1_f32, 0.0) @ w2_f32 + b2_f32, 0.0)
    assert jnp.allclose(out.astype(jnp.float32), ref_f32, atol=7e-2, rtol=7e-2)

    # --- Batch-tiled path (tb chosen so grid has >= 4 even steps for v7x) --
    B_big = 512
    x_big = jax.random.normal(kxb, (B_big, D), dtype=jnp.float32)
    assert _pick_tb(B_big) == 128                      # -> grid = (4,)
    out_big = jax.block_until_ready(generator_forward(x_big, w1, b1, w2, b2))
    assert out_big.shape == (B_big, D) and out_big.dtype == jnp.bfloat16
    ref_big = _reference(x_big, w1, b1, w2, b2)
    assert jnp.allclose(out_big.astype(jnp.float32), ref_big, atol=3e-2, rtol=2e-2)

    print("KERNEL_OK")
</pallas_src>

<mosaic_0001>
module attributes {stable_mosaic.version = 11 : i64} {
  func.func @generator_kernel(%arg0: memref<8x128xf32, #tpu.memory_space<vmem>>, %arg1: memref<128x128xbf16, #tpu.memory_space<vmem>>, %arg2: memref<1x128xf32, #tpu.memory_space<vmem>>, %arg3: memref<128x128xbf16, #tpu.memory_space<vmem>>, %arg4: memref<1x128xf32, #tpu.memory_space<vmem>>, %arg5: memref<8x128xbf16, #tpu.memory_space<vmem>>) attributes {dimension_semantics = [], scalar_prefetch = 0 : i64, scratch_operands = 0 : i64, tpu.core_type = #tpu.core_type<tc>} {
    %c0 = arith.constant 0 : index
    %c0_0 = arith.constant 0 : index
    %0 = vector.load %arg0[%c0, %c0_0] : memref<8x128xf32, #tpu.memory_space<vmem>>, vector<8x128xf32>
    %1 = arith.truncf %0 : vector<8x128xf32> to vector<8x128xbf16>
    %c0_1 = arith.constant 0 : index
    %c0_2 = arith.constant 0 : index
    %2 = vector.load %arg1[%c0_1, %c0_2] : memref<128x128xbf16, #tpu.memory_space<vmem>>, vector<128x128xbf16>
    %cst = arith.constant dense<0.000000e+00> : vector<8x128xf32>
    %3 = tpu.matmul %1, %2, %cst {dimension_numbers = #tpu.dot_dimension_numbers<[1], [0], [0], [1], [0, 0, 1, 1], [], []>} : vector<8x128xbf16>, vector<128x128xbf16>, vector<8x128xf32> -> vector<8x128xf32>
    %c0_3 = arith.constant 0 : index
    %c0_4 = arith.constant 0 : index
    %4 = vector.load %arg2[%c0_3, %c0_4] : memref<1x128xf32, #tpu.memory_space<vmem>>, vector<1x128xf32>
    %5 = vector.broadcast %4 : vector<1x128xf32> to vector<8x128xf32>
    %6 = arith.addf %3, %5 : vector<8x128xf32>
    %cst_5 = arith.constant 0.000000e+00 : f32
    %7 = vector.broadcast %cst_5 : f32 to vector<8x128xf32>
    %8 = arith.maximumf %6, %7 : vector<8x128xf32>
    %9 = arith.truncf %8 : vector<8x128xf32> to vector<8x128xbf16>
    %c0_6 = arith.constant 0 : index
    %c0_7 = arith.constant 0 : index
    %10 = vector.load %arg3[%c0_6, %c0_7] : memref<128x128xbf16, #tpu.memory_space<vmem>>, vector<128x128xbf16>
    %cst_8 = arith.constant dense<0.000000e+00> : vector<8x128xf32>
    %11 = tpu.matmul %9, %10, %cst_8 {dimension_numbers = #tpu.dot_dimension_numbers<[1], [0], [0], [1], [0, 0, 1, 1], [], []>} : vector<8x128xbf16>, vector<128x128xbf16>, vector<8x128xf32> -> vector<8x128xf32>
    %c0_9 = arith.constant 0 : index
    %c0_10 = arith.constant 0 : index
    %12 = vector.load %arg4[%c0_9, %c0_10] : memref<1x128xf32, #tpu.memory_space<vmem>>, vector<1x128xf32>
    %13 = vector.broadcast %12 : vector<1x128xf32> to vector<8x128xf32>
    %14 = arith.addf %11, %13 : vector<8x128xf32>
    %cst_11 = arith.constant 0.000000e+00 : f32
    %15 = vector.broadcast %cst_11 : f32 to vector<8x128xf32>
    %16 = arith.maximumf %14, %15 : vector<8x128xf32>
    %17 = arith.truncf %16 : vector<8x128xf32> to vector<8x128xbf16>
    %c0_12 = arith.constant 0 : index
    %c0_13 = arith.constant 0 : index
    %18 = vector.load %arg5[%c0_12, %c0_13] : memref<8x128xbf16, #tpu.memory_space<vmem>>, vector<8x128xbf16>
    tpu.vector_store %arg5[%c0_12, %c0_13], %17 {strides = array<i32>} : memref<8x128xbf16, #tpu.memory_space<vmem>>, vector<8x128xbf16>,
    return
  }
}

</mosaic_0001>

<llo_original>
// kernel: tpu_custom_call.1
$region0: #{tpu_custom_call.1}
  #allocation0 [shape = 'u32[]', space=smem, size = 0x4, offset = 0x4, fixed_abs, tag = 'smem constant byte address 0x4 - core index']
  #allocation1 [shape = 'u32[144,128]{1,0:T(1,128)}', space=vmem, size = 0x12000, scoped, tag = 'internal scratch']
  %s0 = inlined_call_operand.hbm [shape: f32[8,128], index: 0, kind: input, shape index: {}]
  %s1 = inlined_call_operand.hbm [shape: bf16[128,128], index: 1, kind: input, shape index: {}]
  %s2 = inlined_call_operand.vmem [shape: f32[1,128], index: 2, kind: input, shape index: {}]
  %s3 = inlined_call_operand.hbm [shape: bf16[128,128], index: 3, kind: input, shape index: {}]
  %s4 = inlined_call_operand.vmem [shape: f32[1,128], index: 4, kind: input, shape index: {}]
  %s5 = inlined_call_operand.hbm [shape: bf16[8,128], index: 5, kind: output, shape index: {}]
  %s6 = sld [smem:[#allocation0]]
  $region42: #{tpu_custom_call.1} parent=0
    _
  %s8 = ssub.s32 1, %s6
  %s9 = scalar_select 0, %s8, %s6
  $region1: #{tpu_custom_call.1} parent=0
    #allocation2 [shape = 'u8[4096]{0}', space=vmem, size = 0x1000, scoped, tag = 'input window, operand 0, single buffered']
    #allocation3 [shape = 's32[1]{0}', space=sflag, size = 0x4, scoped, tag = 'scoped memory for tpu_custom_call.1']
    #allocation4 [shape = 's32[1]{0}', space=sflag, size = 0x4, scoped, tag = 'scoped memory for tpu_custom_call.1']
    #allocation5 [shape = 'u8[32768]{0}', space=vmem, size = 0x8000, scoped, tag = 'input window, operand 1, single buffered']
    #allocation6 [shape = 's32[1]{0}', space=sflag, size = 0x4, scoped, tag = 'scoped memory for tpu_custom_call.1']
    #allocation7 [shape = 'u8[32768]{0}', space=vmem, size = 0x8000, scoped, tag = 'input window, operand 3, single buffered']
    #allocation8 [shape = 'u8[2048]{0}', space=vmem, size = 0x800, scoped, tag = 'output window, operand 0, single buffered']
    %10 = vsyncpa [#allocation3], 0
    %11 = vsyncpa [#allocation6], 0
    %12 = vsyncpa [#allocation4], 0
    // Predicated region
    $region2: #{tpu_custom_call.1} parent=1 // pred_check
      _
    $region3: #{tpu_custom_call.1} parent=1 // pred_check_branch
      %14 = sbr.rel (0) target = $region5
    $region4: #{tpu_custom_call.1} parent=1 // pred_region
      %s16 = ssub.s32 128, 128
      %17 = vsyncadd [#allocation3], %s16
      %s19 = sshll.u32 [#allocation2], 4
      %s20 = int_to_ptr.vmem [resolvable:$true] %s19
      %22 = dma.hbm_to_vmem [thread:$0]  %s0, 128, %s20, [#allocation3]
    $region5: #{tpu_custom_call.1} parent=1 // pred_fallthru
      _
    // Predicated region
    $region6: #{tpu_custom_call.1} parent=1 // pred_check
      _
    $region7: #{tpu_custom_call.1} parent=1 // pred_check_branch
      %24 = sbr.rel (0) target = $region9
    $region8: #{tpu_custom_call.1} parent=1 // pred_region
      %s26 = ssub.s32 1024, 1024
      %27 = vsyncadd [#allocation6], %s26
      %s28 = sshll.u32 [#allocation5], 4
      %s29 = int_to_ptr.vmem [resolvable:$true] %s28
      %34 = dma.hbm_to_vmem [thread:$0]  %s1, 1024, %s29, [#allocation6], 64, 64, 4
    $region9: #{tpu_custom_call.1} parent=1 // pred_fallthru
      _
    // Predicated region
    $region10: #{tpu_custom_call.1} parent=1 // pred_check
      _
    $region11: #{tpu_custom_call.1} parent=1 // pred_check_branch
      %36 = sbr.rel (0) target = $region13
    $region12: #{tpu_custom_call.1} parent=1 // pred_region
      _
    $region13: #{tpu_custom_call.1} parent=1 // pred_fallthru
      _
    // Predicated region
    $region14: #{tpu_custom_call.1} parent=1 // pred_check
      _
    $region15: #{tpu_custom_call.1} parent=1 // pred_check_branch
      %38 = sbr.rel (0) target = $region17
    $region16: #{tpu_custom_call.1} parent=1 // pred_region
      %s40 = ssub.s32 1024, 1024
      %41 = vsyncadd [#allocation6], %s40
      %s42 = sshll.u32 [#allocation7], 4
      %s43 = int_to_ptr.vmem [resolvable:$true] %s42
      %48 = dma.hbm_to_vmem [thread:$0]  %s3, 1024, %s43, [#allocation6], 64, 64, 4
    $region17: #{tpu_custom_call.1} parent=1 // pred_fallthru
      _
    // Predicated region
    $region18: #{tpu_custom_call.1} parent=1 // pred_check
      _
    $region19: #{tpu_custom_call.1} parent=1 // pred_check_branch
      %50 = sbr.rel (0) target = $region21
    $region20: #{tpu_custom_call.1} parent=1 // pred_region
      _
    $region21: #{tpu_custom_call.1} parent=1 // pred_fallthru
      _
    // Predicated region
    $region22: #{tpu_custom_call.1} parent=1 // pred_check
      _
    $region23: #{tpu_custom_call.1} parent=1 // pred_check_branch
      %52 = sbr.rel (0) target = $region25
    $region24: #{tpu_custom_call.1} parent=1 // pred_region
      %53 = dma.done [#allocation3], 128
    $region25: #{tpu_custom_call.1} parent=1 // pred_fallthru
      _
    // Predicated region
    $region26: #{tpu_custom_call.1} parent=1 // pred_check
      _
    $region27: #{tpu_custom_call.1} parent=1 // pred_check_branch
      %55 = sbr.rel (0) target = $region29
    $region28: #{tpu_custom_call.1} parent=1 // pred_region
      %56 = dma.done [#allocation6], 1024
    $region29: #{tpu_custom_call.1} parent=1 // pred_fallthru
      _
    // Predicated region
    $region30: #{tpu_custom_call.1} parent=1 // pred_check
      _
    $region31: #{tpu_custom_call.1} parent=1 // pred_check_branch
      %58 = sbr.rel (0) target = $region33
    $region32: #{tpu_custom_call.1} parent=1 // pred_region
      %59 = dma.done [#allocation6], 1024
    $region33: #{tpu_custom_call.1} parent=1 // pred_fallthru
      _
    %v61 = vld [vmem:[#allocation2] sm:$0xff]
    %v62 = vpack.c.bf16 %v61, %v61
    %v63 = vld [vmem:[#allocation5] sm:$0xf]
    %v64 = vld [vmem:[#allocation5 + $0x4] sm:$0xf]
    %v65 = vld [vmem:[#allocation5 + $0x8] sm:$0xf]
    %v66 = vld [vmem:[#allocation5 + $0xc] sm:$0xf]
    %v67 = vld [vmem:[#allocation5 + $0x10] sm:$0xf]
    %v68 = vld [vmem:[#allocation5 + $0x14] sm:$0xf]
    %v69 = vld [vmem:[#allocation5 + $0x18] sm:$0xf]
    %v70 = vld [vmem:[#allocation5 + $0x1c] sm:$0xf]
    %v71 = vld [vmem:[#allocation5 + $0x20] sm:$0xf]
    %v72 = vld [vmem:[#allocation5 + $0x24] sm:$0xf]
    %v73 = vld [vmem:[#allocation5 + $0x28] sm:$0xf]
    %v74 = vld [vmem:[#allocation5 + $0x2c] sm:$0xf]
    %v75 = vld [vmem:[#allocation5 + $0x30] sm:$0xf]
    %v76 = vld [vmem:[#allocation5 + $0x34] sm:$0xf]
    %v77 = vld [vmem:[#allocation5 + $0x38] sm:$0xf]
    %v78 = vld [vmem:[#allocation5 + $0x3c] sm:$0xf]
    %v79 = vld [vmem:[%s2] sm:$0x1]
    %v81 = vlaneseq
    %v82 = vshrl.u32 %v81, 7
    %v83 = vsub.s32 0, %v82
    %v84 = vrot.slane %v79, %v83
    %v102 = vunpack.c.l.b16 %v63
    %v103 = vunpack.c.l.b16 %v64
    %v104 = vunpack.c.l.b16 %v65
    %v105 = vunpack.c.l.b16 %v66
    %v106 = vunpack.c.l.b16 %v67
    %v107 = vunpack.c.l.b16 %v68
    %v108 = vunpack.c.l.b16 %v69
    %v109 = vunpack.c.l.b16 %v70
    %v110 = vunpack.c.l.b16 %v71
    %v111 = vunpack.c.l.b16 %v72
    %v112 = vunpack.c.l.b16 %v73
    %v113 = vunpack.c.l.b16 %v74
    %v114 = vunpack.c.l.b16 %v75
    %v115 = vunpack.c.l.b16 %v76
    %v116 = vunpack.c.l.b16 %v77
    %v117 = vunpack.c.l.b16 %v78
    %v118 = vpack.c.b16 %v103, %v102
    %v119 = vpack.c.b16 %v105, %v104
    %v120 = vpack.c.b16 %v107, %v106
    %v121 = vpack.c.b16 %v109, %v108
    %v122 = vpack.c.b16 %v111, %v110
    %v123 = vpack.c.b16 %v113, %v112
    %v124 = vpack.c.b16 %v115, %v114
    %v125 = vpack.c.b16 %v117, %v116
    %134 = vmatprep.subr.bf16.mxu0 0
    %135 = vmatpush1.bf16.msra.mxu0 %v118
    %136 = vmatprep.subr.bf16.mxu0 0
    %137 = vmatpush1.bf16.msra.mxu0 %v119
    %138 = vmatprep.subr.bf16.mxu0 0
    %139 = vmatpush1.bf16.msra.mxu0 %v120
    %140 = vmatprep.subr.bf16.mxu0 0
    %141 = vmatpush1.bf16.msra.mxu0 %v121
    %142 = vmatprep.subr.bf16.mxu0 0
    %143 = vmatpush1.bf16.msra.mxu0 %v122
    %144 = vmatprep.subr.bf16.mxu0 0
    %145 = vmatpush1.bf16.msra.mxu0 %v123
    %146 = vmatprep.subr.bf16.mxu0 0
    %147 = vmatpush1.bf16.msra.mxu0 %v124
    %148 = vmatprep.subr.bf16.mxu0 0
    %149 = vmatpush1.bf16.msra.mxu0 %v125
    %150 = vmatprep.subr.bf16.mxu0 0
    %151 = vmatpush1.bf16.msra.mxu0 0
    %152 = vmatprep.subr.bf16.mxu0 0
    %153 = vmatpush1.bf16.msra.mxu0 0
    %154 = vmatprep.subr.bf16.mxu0 0
    %155 = vmatpush1.bf16.msra.mxu0 0
    %156 = vmatprep.subr.bf16.mxu0 0
    %157 = vmatpush1.bf16.msra.mxu0 0
    %158 = vmatprep.subr.bf16.mxu0 0
    %159 = vmatpush1.bf16.msra.mxu0 0
    %160 = vmatprep.subr.bf16.mxu0 0
    %161 = vmatpush1.bf16.msra.mxu0 0
    %162 = vmatprep.subr.bf16.mxu0 0
    %163 = vmatpush1.bf16.msra.mxu0 0
    %164 = vmatprep.subr.bf16.mxu0 0
    %165 = vmatpush1.bf16.msra.mxu0 0
    %166 = vmatprep.mubr.bf16.mxu0 0
    %167 = vmatmul.mubr.bf16.gmra.mrb[0].mxu0 %v62
    %v168 = vpop.f32.mrb[0].mxu0
    %v169 = vadd.f32 %v84, %v168
    %v170 = vpop.f32.mrb[0].mxu0
    %v171 = vpop.f32.mrb[0].mxu0
    %v172 = vpop.f32.mrb[0].mxu0
    %173 = vdwg.mxu0
    %v174 = vmax.f32 %v169, 0.0
    %v175 = vpack.c.bf16 %v174, %v174
    %v176 = vld [vmem:[#allocation7] sm:$0xf]
    %v177 = vld [vmem:[#allocation7 + $0x4] sm:$0xf]
    %v178 = vld [vmem:[#allocation7 + $0x8] sm:$0xf]
    %v179 = vld [vmem:[#allocation7 + $0xc] sm:$0xf]
    %v180 = vld [vmem:[#allocation7 + $0x10] sm:$0xf]
    %v181 = vld [vmem:[#allocation7 + $0x14] sm:$0xf]
    %v182 = vld [vmem:[#allocation7 + $0x18] sm:$0xf]
    %v183 = vld [vmem:[#allocation7 + $0x1c] sm:$0xf]
    %v184 = vld [vmem:[#allocation7 + $0x20] sm:$0xf]
    %v185 = vld [vmem:[#allocation7 + $0x24] sm:$0xf]
    %v186 = vld [vmem:[#allocation7 + $0x28] sm:$0xf]
    %v187 = vld [vmem:[#allocation7 + $0x2c] sm:$0xf]
    %v188 = vld [vmem:[#allocation7 + $0x30] sm:$0xf]
    %v189 = vld [vmem:[#allocation7 + $0x34] sm:$0xf]
    %v190 = vld [vmem:[#allocation7 + $0x38] sm:$0xf]
    %v191 = vld [vmem:[#allocation7 + $0x3c] sm:$0xf]
    %v192 = vld [vmem:[%s4] sm:$0x1]
    %v194 = vlaneseq
    %v195 = vshrl.u32 %v194, 7
    %v196 = vsub.s32 0, %v195
    %v197 = vrot.slane %v192, %v196
    %v215 = vunpack.c.l.b16 %v176
    %v216 = vunpack.c.l.b16 %v177
    %v217 = vunpack.c.l.b16 %v178
    %v218 = vunpack.c.l.b16 %v179
    %v219 = vunpack.c.l.b16 %v180
    %v220 = vunpack.c.l.b16 %v181
    %v221 = vunpack.c.l.b16 %v182
    %v222 = vunpack.c.l.b16 %v183
    %v223 = vunpack.c.l.b16 %v184
    %v224 = vunpack.c.l.b16 %v185
    %v225 = vunpack.c.l.b16 %v186
    %v226 = vunpack.c.l.b16 %v187
    %v227 = vunpack.c.l.b16 %v188
    %v228 = vunpack.c.l.b16 %v189
    %v229 = vunpack.c.l.b16 %v190
    %v230 = vunpack.c.l.b16 %v191
    %v231 = vpack.c.b16 %v216, %v215
    %v232 = vpack.c.b16 %v218, %v217
    %v233 = vpack.c.b16 %v220, %v219
    %v234 = vpack.c.b16 %v222, %v221
    %v235 = vpack.c.b16 %v224, %v223
    %v236 = vpack.c.b16 %v226, %v225
    %v237 = vpack.c.b16 %v228, %v227
    %v238 = vpack.c.b16 %v230, %v229
    %247 = vmatprep.subr.bf16.mxu0 0
    %248 = vmatpush1.bf16.msra.mxu0 %v231
    %249 = vmatprep.subr.bf16.mxu0 0
    %250 = vmatpush1.bf16.msra.mxu0 %v232
    %251 = vmatprep.subr.bf16.mxu0 0
    %252 = vmatpush1.bf16.msra.mxu0 %v233
    %253 = vmatprep.subr.bf16.mxu0 0
    %254 = vmatpush1.bf16.msra.mxu0 %v234
    %255 = vmatprep.subr.bf16.mxu0 0
    %256 = vmatpush1.bf16.msra.mxu0 %v235
    %257 = vmatprep.subr.bf16.mxu0 0
    %258 = vmatpush1.bf16.msra.mxu0 %v236
    %259 = vmatprep.subr.bf16.mxu0 0
    %260 = vmatpush1.bf16.msra.mxu0 %v237
    %261 = vmatprep.subr.bf16.mxu0 0
    %262 = vmatpush1.bf16.msra.mxu0 %v238
    %263 = vmatprep.subr.bf16.mxu0 0
    %264 = vmatpush1.bf16.msra.mxu0 0
    %265 = vmatprep.subr.bf16.mxu0 0
    %266 = vmatpush1.bf16.msra.mxu0 0
    %267 = vmatprep.subr.bf16.mxu0 0
    %268 = vmatpush1.bf16.msra.mxu0 0
    %269 = vmatprep.subr.bf16.mxu0 0
    %270 = vmatpush1.bf16.msra.mxu0 0
    %271 = vmatprep.subr.bf16.mxu0 0
    %272 = vmatpush1.bf16.msra.mxu0 0
    %273 = vmatprep.subr.bf16.mxu0 0
    %274 = vmatpush1.bf16.msra.mxu0 0
    %275 = vmatprep.subr.bf16.mxu0 0
    %276 = vmatpush1.bf16.msra.mxu0 0
    %277 = vmatprep.subr.bf16.mxu0 0
    %278 = vmatpush1.bf16.msra.mxu0 0
    %279 = vmatprep.mubr.bf16.mxu0 0
    %280 = vmatmul.mubr.bf16.gmra.mrb[0].mxu0 %v175
    %v281 = vpop.f32.mrb[0].mxu0
    %v282 = vadd.f32 %v197, %v281
    %v283 = vpop.f32.mrb[0].mxu0
    %v284 = vpop.f32.mrb[0].mxu0
    %v285 = vpop.f32.mrb[0].mxu0
    %286 = vdwg.mxu0
    %v287 = vmax.f32 %v282, 0.0
    %v288 = vpack.c.bf16 %v287, %v287
    %289 = vst [vmem:[#allocation8] sm:$0xf] %v288
    // Predicated region
    $region34: #{tpu_custom_call.1} parent=1 // pred_check
      _
    $region35: #{tpu_custom_call.1} parent=1 // pred_check_branch
      %291 = sbr.rel (0) target = $region37
    $region36: #{tpu_custom_call.1} parent=1 // pred_region
      %s293 = ssub.s32 64, 64
      %294 = vsyncadd [#allocation4], %s293
      %s296 = sshll.u32 [#allocation8], 4
      %s297 = int_to_ptr.vmem [resolvable:$true] %s296
      %299 = dma.vmem_to_hbm [thread:$0]  %s297, 64, %s5, [#allocation4]
    $region37: #{tpu_custom_call.1} parent=1 // pred_fallthru
      _
    // Predicated region
    $region38: #{tpu_custom_call.1} parent=1 // pred_check
      _
    $region39: #{tpu_custom_call.1} parent=1 // pred_check_branch
      %301 = sbr.rel (0) target = $region41
    $region40: #{tpu_custom_call.1} parent=1 // pred_region
      %302 = dma.done [#allocation4], 64
    $region41: #{tpu_custom_call.1} parent=1 // pred_fallthru
      _
    %303 = vsyncpa [#allocation3], 1
    %304 = vsyncpa [#allocation6], 1
    %305 = vsyncpa [#allocation4], 1

</llo_original>
